<compile_context>
chip_gen: v7x
topology: tpu7x:2x2x1
jax: 0.10.0
libtpu: 0.0.40
codegen_flags: <defaults>
</compile_context>

<pallas_src>
import functools

import jax
import jax.numpy as jnp
from jax import lax
from jax.experimental import pallas as pl
from jax.experimental.pallas import tpu as pltpu


def _physical_vmem_bytes():
    try:
        return int(pltpu.get_tpu_info().vmem_capacity_bytes)
    except Exception:
        return 64 << 20  # conservative (v7x per-TC VMEM)


def _pick_tile_n(N, V, itemsize):
    """Largest row-tile that keeps the pipelined working set well inside VMEM."""
    budget = int(_physical_vmem_bytes() * 0.5)  # headroom for temps/outputs/compiler scratch
    # 2 inputs x 2 pipeline buffers (input dtype) + ~4 full-tile f32 temporaries
    per_row = 2 * 2 * V * itemsize + 4 * V * 4
    tile = budget // max(per_row, 1)
    tile = max(8, min(tile, 1024))
    return tile


def _ce_label_smoothing_kernel(x_ref, t_ref, batch_ref, *, padding_idx):
    x = x_ref[...].astype(jnp.float32)          # (tile_n, V) logits
    t = t_ref[...].astype(jnp.float32)          # (tile_n, V) target probs

    # --- log_softmax along vocab axis (axis=1) ---
    m = jnp.max(x, axis=1, keepdims=True)
    z = x - m
    lse = jnp.log(jnp.sum(jnp.exp(z), axis=1, keepdims=True))
    logp = z - lse

    # --- fused mask: target[:, padding_idx] = 0  AND  xlogy convention (0 where t==0) ---
    col = lax.broadcasted_iota(jnp.int32, t.shape, 1)
    mask = (t > 0.0) & (col != padding_idx)
    safe_t = jnp.where(mask, t, 1.0)
    elem = jnp.where(mask, t * (jnp.log(safe_t) - logp), 0.0)

    # per-row sum -> batch_loss block
    batch_ref[...] = jnp.sum(elem, axis=1, keepdims=True)


def cross_entropy_label_smoothing(x, target, padding_idx, *, tile_n=None):
    """Returns (sum_loss scalar, batch_loss (N,)) matching the PyTorch module."""
    N, V = x.shape
    itemsize = jnp.dtype(x.dtype).itemsize

    if tile_n is None:
        tile_n = _pick_tile_n(N, V, itemsize)

    # Sublane alignment: f32 -> 8 rows, bf16 -> 16 rows.
    mult = 8 if itemsize >= 4 else (16 if itemsize == 2 else 32)
    tile_n = max(mult, (min(tile_n, max(N, mult)) // mult) * mult)

    # Pad rows to a tile multiple; padded rows have t == 0 -> contribute 0 loss.
    n_pad = pl.cdiv(N, tile_n) * tile_n
    if n_pad != N:
        x = jnp.pad(x, ((0, n_pad - N), (0, 0)))
        target = jnp.pad(target, ((0, n_pad - N), (0, 0)))
    grid = (n_pad // tile_n,)

    # VMEM limit sized to the actual working set (double-buffered inputs + f32 temps).
    block_in_bytes = tile_n * V * itemsize
    block_tmp_bytes = tile_n * V * 4
    needed = 2 * 2 * block_in_bytes + 4 * block_tmp_bytes + 4 * tile_n * 4
    vmem_limit = max(16 << 20, int(needed * 1.3))
    vmem_limit = min(vmem_limit, _physical_vmem_bytes() * 9 // 10)

    kernel = functools.partial(_ce_label_smoothing_kernel, padding_idx=padding_idx)

    batch_loss = pl.pallas_call(
        kernel,
        out_shape=jax.ShapeDtypeStruct((n_pad, 1), jnp.float32),
        grid_spec=pltpu.PrefetchScalarGridSpec(
            num_scalar_prefetch=0,
            grid=grid,
            in_specs=[
                pl.BlockSpec((tile_n, V), lambda i: (i, 0)),
                pl.BlockSpec((tile_n, V), lambda i: (i, 0)),
            ],
            out_specs=pl.BlockSpec((tile_n, 1), lambda i: (i, 0)),
        ),
        compiler_params=pltpu.CompilerParams(
            dimension_semantics=("parallel",),   # row tiles are independent
            vmem_limit_bytes=vmem_limit,
        ),
    )(x, target)

    batch_loss = batch_loss[:N, 0]
    sum_loss = jnp.sum(batch_loss)   # global reduction done outside the kernel
    return sum_loss, batch_loss


def _reference(x, target, padding_idx):
    logp = jax.nn.log_softmax(x.astype(jnp.float32), axis=1)
    t = target.astype(jnp.float32).at[:, padding_idx].set(0.0)
    elem = jnp.where(t > 0.0, t * (jnp.log(jnp.where(t > 0.0, t, 1.0)) - logp), 0.0)
    return jnp.sum(elem), jnp.sum(elem, axis=1)


if __name__ == "__main__":
    key = jax.random.PRNGKey(0)
    kx, kt = jax.random.split(key)

    N, V = 16, 32            # small shapes: batch of 16 rows, vocab size 32
    padding_idx = 0

    x = jax.random.normal(kx, (N, V), dtype=jnp.float32)                 # logits
    target = jax.nn.softmax(jax.random.normal(kt, (N, V)), axis=1)       # prob dist

    sum_loss, batch_loss = cross_entropy_label_smoothing(x, target, padding_idx)
    jax.block_until_ready((sum_loss, batch_loss))

    # sanity check against a pure-JAX reference
    ref_sum, ref_batch = _reference(x, target, padding_idx)
    assert jnp.allclose(sum_loss, ref_sum, rtol=1e-5, atol=1e-5)
    assert jnp.allclose(batch_loss, ref_batch, rtol=1e-5, atol=1e-5)

    print("KERNEL_OK")
</pallas_src>

<mosaic_0001>
module attributes {stable_mosaic.version = 11 : i64} {
  func.func @_ce_label_smoothing_kernel(%arg0: i32, %arg1: memref<16x32xf32, #tpu.memory_space<vmem>>, %arg2: memref<16x32xf32, #tpu.memory_space<vmem>>, %arg3: memref<16x1xf32, #tpu.memory_space<vmem>>) attributes {dimension_semantics = [#tpu.dimension_semantics<parallel>], iteration_bounds = array<i64: 1>, scalar_prefetch = 0 : i64, scratch_operands = 0 : i64, tpu.core_type = #tpu.core_type<tc>, window_params = [{transform_indices = @transform_0, window_bounds = array<i64: 16, 32>}, {transform_indices = @transform_1, window_bounds = array<i64: 16, 32>}, {transform_indices = @transform_2, window_bounds = array<i64: 16, 1>}]} {
    %c0 = arith.constant 0 : index
    %c0_0 = arith.constant 0 : index
    %0 = vector.load %arg1[%c0, %c0_0] : memref<16x32xf32, #tpu.memory_space<vmem>>, vector<16x32xf32>
    %c0_1 = arith.constant 0 : index
    %c0_2 = arith.constant 0 : index
    %1 = vector.load %arg2[%c0_1, %c0_2] : memref<16x32xf32, #tpu.memory_space<vmem>>, vector<16x32xf32>
    %cst = arith.constant dense<0xFF800000> : vector<16xf32>
    %2 = vector.multi_reduction <maximumf>, %0, %cst [1] : vector<16x32xf32> to vector<16xf32>
    %3 = vector.shape_cast %2 : vector<16xf32> to vector<16x1xf32>
    %4 = vector.broadcast %3 : vector<16x1xf32> to vector<16x32xf32>
    %5 = arith.subf %0, %4 : vector<16x32xf32>
    %6 = math.exp %5 : vector<16x32xf32>
    %cst_3 = arith.constant dense<0.000000e+00> : vector<16xf32>
    %7 = vector.multi_reduction <add>, %6, %cst_3 [1] : vector<16x32xf32> to vector<16xf32>
    %8 = vector.shape_cast %7 : vector<16xf32> to vector<16x1xf32>
    %9 = math.log %8 : vector<16x1xf32>
    %10 = vector.broadcast %9 : vector<16x1xf32> to vector<16x32xf32>
    %11 = arith.subf %5, %10 : vector<16x32xf32>
    %12 = tpu.iota {dimensions = array<i32: 1>} : vector<16x32xi32>
    %cst_4 = arith.constant 0.000000e+00 : f32
    %13 = vector.broadcast %cst_4 : f32 to vector<16x32xf32>
    %14 = arith.cmpf ogt, %1, %13 : vector<16x32xf32>
    %c0_i32 = arith.constant 0 : i32
    %15 = vector.broadcast %c0_i32 : i32 to vector<16x32xi32>
    %16 = arith.cmpi ne, %12, %15 : vector<16x32xi32>
    %17 = arith.andi %14, %16 : vector<16x32xi1>
    %cst_5 = arith.constant 1.000000e+00 : f32
    %18 = vector.broadcast %cst_5 : f32 to vector<16x32xf32>
    %19 = arith.select %17, %1, %18 : vector<16x32xi1>, vector<16x32xf32>
    %20 = math.log %19 : vector<16x32xf32>
    %21 = arith.subf %20, %11 : vector<16x32xf32>
    %22 = arith.mulf %1, %21 : vector<16x32xf32>
    %cst_6 = arith.constant 0.000000e+00 : f32
    %23 = vector.broadcast %cst_6 : f32 to vector<16x32xf32>
    %24 = arith.select %17, %22, %23 : vector<16x32xi1>, vector<16x32xf32>
    %cst_7 = arith.constant dense<0.000000e+00> : vector<16xf32>
    %25 = vector.multi_reduction <add>, %24, %cst_7 [1] : vector<16x32xf32> to vector<16xf32>
    %26 = vector.shape_cast %25 : vector<16xf32> to vector<16x1xf32>
    %c0_8 = arith.constant 0 : index
    %c0_9 = arith.constant 0 : index
    %27 = vector.load %arg3[%c0_8, %c0_9] : memref<16x1xf32, #tpu.memory_space<vmem>>, vector<16x1xf32>
    tpu.vector_store %arg3[%c0_8, %c0_9], %26 {strides = array<i32>} : memref<16x1xf32, #tpu.memory_space<vmem>>, vector<16x1xf32>,
    return
  }
  func.func @transform_0(%arg0: i32) -> (i32, i32) {
    %c0_i32 = arith.constant 0 : i32
    %c0_i32_0 = arith.constant 0 : i32
    return %arg0, %c0_i32 : i32, i32
  }
  func.func @transform_1(%arg0: i32) -> (i32, i32) {
    %c0_i32 = arith.constant 0 : i32
    %c0_i32_0 = arith.constant 0 : i32
    return %arg0, %c0_i32 : i32, i32
  }
  func.func @transform_2(%arg0: i32) -> (i32, i32) {
    %c0_i32 = arith.constant 0 : i32
    %c0_i32_0 = arith.constant 0 : i32
    return %arg0, %c0_i32 : i32, i32
  }
}

</mosaic_0001>

<llo_original>
// kernel: tpu_custom_call.1
$region0: #{tpu_custom_call.1}
  #allocation0 [shape = 'u32[]', space=smem, size = 0x4, offset = 0x4, fixed_abs, tag = 'smem constant byte address 0x4 - core index']
  #allocation1 [shape = 'u32[144,128]{1,0:T(1,128)}', space=vmem, size = 0x12000, scoped, tag = 'internal scratch']
  %s0 = inlined_call_operand.hbm [shape: f32[16,32], index: 0, kind: input, shape index: {}]
  %s1 = inlined_call_operand.hbm [shape: f32[16,32], index: 1, kind: input, shape index: {}]
  %s2 = inlined_call_operand.vmem [shape: f32[16,1], index: 2, kind: output, shape index: {}]
  %s3 = sld [smem:[#allocation0]]
  $region26: #{tpu_custom_call.1} parent=0
    _
  %s5 = ssub.s32 1, %s3
  %s6 = scalar_select 0, %s5, %s3
  $region1: #{tpu_custom_call.1} parent=0
    #allocation2 [shape = 'u8[8192]{0}', space=vmem, size = 0x2000, scoped, tag = 'input window, operand 0, single buffered']
    #allocation3 [shape = 's32[1]{0}', space=sflag, size = 0x4, scoped, tag = 'scoped memory for tpu_custom_call.1']
    #allocation4 [shape = 'u8[8192]{0}', space=vmem, size = 0x2000, scoped, tag = 'input window, operand 1, single buffered']
    #allocation5 [shape = 's32[1]{0}', space=sflag, size = 0x4, scoped, tag = 'scoped memory for tpu_custom_call.1']
    %7 = vsyncpa [#allocation3], 0
    %8 = vsyncpa [#allocation5], 0
    // Predicated region
    $region2: #{tpu_custom_call.1} parent=1 // pred_check
      _
    $region3: #{tpu_custom_call.1} parent=1 // pred_check_branch
      %10 = sbr.rel (0) target = $region5
    $region4: #{tpu_custom_call.1} parent=1 // pred_region
      %s12 = ssub.s32 256, 256
      %13 = vsyncadd [#allocation3], %s12
      %s14 = sshll.u32 [#allocation2], 4
      %s15 = int_to_ptr.vmem [resolvable:$true] %s14
      %20 = dma.hbm_to_vmem [thread:$0]  %s0, 256, %s15, [#allocation3], 128, 128, 8
    $region5: #{tpu_custom_call.1} parent=1 // pred_fallthru
      _
    // Predicated region
    $region6: #{tpu_custom_call.1} parent=1 // pred_check
      _
    $region7: #{tpu_custom_call.1} parent=1 // pred_check_branch
      %22 = sbr.rel (0) target = $region9
    $region8: #{tpu_custom_call.1} parent=1 // pred_region
      %s24 = ssub.s32 256, 256
      %25 = vsyncadd [#allocation5], %s24
      %s26 = sshll.u32 [#allocation4], 4
      %s27 = int_to_ptr.vmem [resolvable:$true] %s26
      %32 = dma.hbm_to_vmem [thread:$0]  %s1, 256, %s27, [#allocation5], 128, 128, 8
    $region9: #{tpu_custom_call.1} parent=1 // pred_fallthru
      _
    // Predicated region
    $region10: #{tpu_custom_call.1} parent=1 // pred_check
      _
    $region11: #{tpu_custom_call.1} parent=1 // pred_check_branch
      %34 = sbr.rel (0) target = $region13
    $region12: #{tpu_custom_call.1} parent=1 // pred_region
      %35 = dma.done [#allocation3], 256
    $region13: #{tpu_custom_call.1} parent=1 // pred_fallthru
      _
    // Predicated region
    $region14: #{tpu_custom_call.1} parent=1 // pred_check
      _
    $region15: #{tpu_custom_call.1} parent=1 // pred_check_branch
      %37 = sbr.rel (0) target = $region17
    $region16: #{tpu_custom_call.1} parent=1 // pred_region
      %38 = dma.done [#allocation5], 256
    $region17: #{tpu_custom_call.1} parent=1 // pred_fallthru
      _
    %v39 = vld [vmem:[#allocation2] sm:$0xff]
    %v40 = vld [vmem:[#allocation2 + $0x8] sm:$0xff]
    %v41 = vld [vmem:[#allocation4] sm:$0xff]
    %v42 = vld [vmem:[#allocation4 + $0x8] sm:$0xff]
    %vm43 = vcmask 261120
    %v44 = vsel %vm43, %v39, -inf
    %45 = vmax.xlane.f32.xlu0 %v44
    %v46 = vpop.xlane.xlu0 %45
    %v47 = vsel %vm43, %v40, -inf
    %48 = vmax.xlane.f32.xlu0 %v47
    %v49 = vpop.xlane.xlu0 %48
    %v50 = vsub.f32 %v39, %v46
    %v51 = vsub.f32 %v40, %v49
    %v52 = vmul.f32 %v50, 1.442695
    %v53 = vpow.pop %v52
    %v54 = vmul.f32 %v51, 1.442695
    %v55 = vpow.pop %v54
    %v56 = vsel %vm43, %v53, 0.0
    %57 = vadd.xlane.f32.xlu0 %v56
    %v58 = vpop.xlane.xlu0 %57
    %v59 = vsel %vm43, %v55, 0.0
    %60 = vadd.xlane.f32.xlu0 %v59
    %v61 = vpop.xlane.xlu0 %60
    %v62 = vlog2.pop %v58
    %v63 = vmul.f32 %v62, 0.6931472
    %v64 = vlog2.pop %v61
    %v65 = vmul.f32 %v64, 0.6931472
    %v66 = vsub.f32 %v50, %v63
    %v67 = vsub.f32 %v51, %v65
    %v68 = vlaneseq
    %v69 = vand.u32 %v68, 127
    %vm70 = vcmp.gt.f32.partialorder %v41, 0.0
    %vm71 = vcmp.gt.f32.partialorder %v42, 0.0
    %vm72 = vcmp.ne.s32.totalorder %v69, 0
    %vm73 = vmand %vm70, %vm72
    %vm74 = vmand %vm71, %vm72
    %v75 = vsel %vm73, %v41, 1.0
    %v76 = vsel %vm74, %v42, 1.0
    %v77 = vlog2.pop %v75
    %v78 = vmul.f32 %v77, 0.6931472
    %v79 = vlog2.pop %v76
    %v80 = vmul.f32 %v79, 0.6931472
    %v81 = vsub.f32 %v78, %v66
    %v82 = vsub.f32 %v80, %v67
    %v83 = vmul.f32 %v41, %v81
    %v84 = vmul.f32 %v42, %v82
    %v85 = vsel %vm73, %v83, 0.0
    %v86 = vsel %vm74, %v84, 0.0
    %v87 = vsel %vm43, %v85, 0.0
    %88 = vadd.xlane.f32.xlu0 %v87
    %v89 = vpop.xlane.xlu0 %88
    %v90 = vsel %vm43, %v86, 0.0
    %91 = vadd.xlane.f32.xlu0 %v90
    %v92 = vpop.xlane.xlu0 %91
    %vm93 = vcmask 7168
    %94 = vst.msk [vmem:[%s2] sm:$0xff] %vm93, %v89
    %95 = vst.msk [vmem:[%s2 + $0x8] sm:$0xff] %vm93, %v92
    // Predicated region
    $region18: #{tpu_custom_call.1} parent=1 // pred_check
      _
    $region19: #{tpu_custom_call.1} parent=1 // pred_check_branch
      %97 = sbr.rel (0) target = $region21
    $region20: #{tpu_custom_call.1} parent=1 // pred_region
      _
    $region21: #{tpu_custom_call.1} parent=1 // pred_fallthru
      _
    // Predicated region
    $region22: #{tpu_custom_call.1} parent=1 // pred_check
      _
    $region23: #{tpu_custom_call.1} parent=1 // pred_check_branch
      %99 = sbr.rel (0) target = $region25
    $region24: #{tpu_custom_call.1} parent=1 // pred_region
      _
    $region25: #{tpu_custom_call.1} parent=1 // pred_fallthru
      _
    %100 = vsyncpa [#allocation3], 1
    %101 = vsyncpa [#allocation5], 1

</llo_original>
